<compile_context>
chip_gen: v7x
topology: tpu7x:2x2x1
jax: 0.10.0
libtpu: 0.0.40
codegen_flags: <defaults>
</compile_context>

<pallas_src>
import functools

import jax
import jax.numpy as jnp
from jax.experimental import pallas as pl
from jax.experimental.pallas import tpu as pltpu

_LOG2_E = 1.4426950408889634


def _power(x, gamma):
    """x**gamma; integer gamma uses VPU multiplies instead of exp(g*log(x))."""
    g = float(gamma)
    if g.is_integer() and 0 <= g <= 8:
        n = int(g)
        if n == 0:
            return jnp.ones_like(x)
        r = x
        for _ in range(n - 1):
            r = r * x
        return r
    return jnp.power(x, jnp.float32(g))


def _focal_loss_kernel(pred_ref, tgt_ref, out_ref, *,
                       gamma, epsilon, n_rows, tile_rows, tiles_per_slab):
    slab = pl.program_id(0)      # parallel axis (slab of the batch)
    i = pl.program_id(1)         # reduction axis (tiles within the slab)

    @pl.when(i == 0)
    def _():
        out_ref[...] = jnp.zeros_like(out_ref)

    logits = pred_ref[...].astype(jnp.float32)                     # [TB, C]

    # Numerically stable softmax over the class axis, reciprocal hoisted to
    # [TB,1] (exact, to keep parity with the reference), then + epsilon.
    m = jnp.max(logits, axis=1, keepdims=True)
    e = jnp.exp(logits - m)
    denom = jnp.sum(e, axis=1, keepdims=True)                      # [TB, 1]
    inv = pl.reciprocal(denom, approx=False)                       # [TB, 1]
    p = e * inv + jnp.float32(epsilon)                             # [TB, C]

    # Target-column mask (boolean only; no dense f32 one-hot materialized).
    tgt = tgt_ref[...]                                             # [TB, 1] int32
    class_ids = jax.lax.broadcasted_iota(jnp.int32, p.shape, 1)
    is_tgt = class_ids == tgt                                      # [TB, C] bool

    # Dense negative branch (alpha and log2(e) folded into the final scale):
    #   neg_c = p_c^gamma * log(1 - p_c)
    neg = _power(p, gamma) * jnp.log(1.0 - p)                      # [TB, C]
    s_neg = jnp.sum(neg, axis=1, keepdims=True)                    # [TB, 1]

    # Target-column terms derived analytically from p_t: TB transcendentals,
    # not TB*C, and no second dense masked reduction.
    p_t = jnp.sum(jnp.where(is_tgt, p, 0.0), axis=1, keepdims=True)  # [TB, 1]
    neg_t = _power(p_t, gamma) * jnp.log(1.0 - p_t)                # dense term @ target col
    pos_t = _power(1.0 - p_t, gamma) * jnp.log(p_t)                # positive branch

    row_sum = s_neg - neg_t + pos_t                                # [TB, 1]

    # Mask rows that are only batch padding.
    base = (slab * tiles_per_slab + i) * tile_rows
    row_ids = base + jax.lax.broadcasted_iota(jnp.int32, row_sum.shape, 0)
    row_sum = jnp.where(row_ids < n_rows, row_sum, 0.0)

    # Resident vector-shaped accumulator: no per-step sublane reduction,
    # no loop-carried scalar dependency.  Final sum + scale in the wrapper.
    out_ref[...] += row_sum


def _vmem_limit_bytes():
    cap = 128 * 1024 * 1024
    try:
        cap = int(pltpu.get_tpu_info().vmem_capacity_bytes)
    except Exception:
        pass
    # ~48 MiB on v7x (64 MiB/TC), ~96 MiB on v5e/v6e (128 MiB).
    return max(16 * 1024 * 1024, min(cap * 3 // 4, 96 * 1024 * 1024))


def _choose_block_rows(n_rows, n_classes, in_itemsize, budget_bytes, block_rows=None):
    if block_rows is None:
        # Working set per row: double-buffered input stream (2 x itemsize)
        # plus ~6 live [TB, C] f32 temporaries inside the kernel.
        bytes_per_row = n_classes * (2 * in_itemsize + 6 * 4)
        block_rows = max(8, budget_bytes // max(1, bytes_per_row))
    block_rows = max(1, min(block_rows, n_rows))
    return ((block_rows + 7) // 8) * 8  # sublane multiple


def cfocal_loss(pred, target, alpha=0.5, gamma=2, epsilon=1e-9,
                block_rows=None, num_slabs=2):
    """pred: [B, C] float logits (f32 or bf16); target: [B] int class ids -> scalar."""
    B, C = pred.shape
    vmem_limit = _vmem_limit_bytes()
    budget = min(8 * 1024 * 1024, vmem_limit // 4)
    itemsize = jnp.dtype(pred.dtype).itemsize
    tb = _choose_block_rows(B, C, itemsize, budget, block_rows)

    tiles_total = (B + tb - 1) // tb
    P = max(1, min(int(num_slabs), tiles_total))      # parallel slabs (v7x: 2 TCs)
    tiles_per_slab = (tiles_total + P - 1) // P
    b_pad = P * tiles_per_slab * tb

    if b_pad != B:
        pred = jnp.pad(pred, ((0, b_pad - B), (0, 0)))
        target = jnp.pad(target, (0, b_pad - B))
    target2d = target.astype(jnp.int32).reshape(b_pad, 1)

    kernel = functools.partial(
        _focal_loss_kernel,
        gamma=float(gamma), epsilon=float(epsilon),
        n_rows=B, tile_rows=tb, tiles_per_slab=tiles_per_slab,
    )

    partials = pl.pallas_call(
        kernel,
        out_shape=jax.ShapeDtypeStruct((P, tb, 1), jnp.float32),
        grid_spec=pltpu.PrefetchScalarGridSpec(
            num_scalar_prefetch=0,
            grid=(P, tiles_per_slab),
            in_specs=[
                pl.BlockSpec((tb, C), lambda p, i: (p * tiles_per_slab + i, 0)),
                pl.BlockSpec((tb, 1), lambda p, i: (p * tiles_per_slab + i, 0)),
            ],
            # Leading dim squeezed; block index constant along the reduction
            # axis -> resident per-slab accumulator.
            out_specs=pl.BlockSpec((None, tb, 1), lambda p, i: (p, 0, 0)),
        ),
        compiler_params=pltpu.CompilerParams(
            dimension_semantics=("parallel", "arbitrary"),
            vmem_limit_bytes=vmem_limit,
        ),
    )(pred, target2d)

    # loss = -(alpha * log2(e) / (B*C)) * sum_{b,c} (single fused scale)
    final_scale = jnp.float32(-(float(alpha) * _LOG2_E) / (B * C))
    return jnp.sum(partials) * final_scale


def _reference(pred, target, alpha=0.5, gamma=2, epsilon=1e-9):
    p = jax.nn.softmax(pred.astype(jnp.float32), axis=1) + epsilon
    tar = jax.nn.one_hot(target, pred.shape[1], dtype=jnp.float32)
    term = tar * alpha * jnp.power(1.0 - p, gamma) * jnp.log2(p) \
         + (1.0 - tar) * alpha * jnp.power(p, gamma) * jnp.log2(1.0 - p)
    return jnp.mean(-jnp.mean(term, axis=1))


if __name__ == "__main__":
    key = jax.random.PRNGKey(0)
    k1, k2, k3, k4, k5, k6 = jax.random.split(key, 6)

    # Case 1: single tile, single slab (B=8, C=16).
    B, C = 8, 16
    pred = jax.random.normal(k1, (B, C), dtype=jnp.float32)
    target = jax.random.randint(k2, (B,), 0, C, dtype=jnp.int32)
    loss = cfocal_loss(pred, target)
    jax.block_until_ready(loss)
    ref = _reference(pred, target)
    assert jnp.allclose(loss, ref, rtol=1e-5, atol=1e-6), (loss, ref)

    # Case 2: two parallel slabs x two reduction tiles + batch padding (B=20).
    B2, C2 = 20, 16
    pred2 = jax.random.normal(k3, (B2, C2), dtype=jnp.float32)
    target2 = jax.random.randint(k4, (B2,), 0, C2, dtype=jnp.int32)
    loss2 = cfocal_loss(pred2, target2, block_rows=8)
    jax.block_until_ready(loss2)
    ref2 = _reference(pred2, target2)
    assert jnp.allclose(loss2, ref2, rtol=1e-5, atol=1e-6), (loss2, ref2)

    # Case 3: bf16 logits, lane-wide class axis (B=64, C=128).
    B3, C3 = 64, 128
    pred3 = jax.random.normal(k5, (B3, C3), dtype=jnp.float32).astype(jnp.bfloat16)
    target3 = jax.random.randint(k6, (B3,), 0, C3, dtype=jnp.int32)
    loss3 = cfocal_loss(pred3, target3)
    jax.block_until_ready(loss3)
    ref3 = _reference(pred3, target3)
    assert jnp.allclose(loss3, ref3, rtol=1e-5, atol=1e-6), (loss3, ref3)

    print("KERNEL_OK")
</pallas_src>

<mosaic_0001>
module attributes {stable_mosaic.version = 11 : i64} {
  func.func @_focal_loss_kernel(%arg0: i32, %arg1: i32, %arg2: memref<8x16xf32, #tpu.memory_space<vmem>>, %arg3: memref<8x1xi32, #tpu.memory_space<vmem>>, %arg4: memref<1x8x1xf32, #tpu.memory_space<vmem>>) attributes {dimension_semantics = [#tpu.dimension_semantics<parallel>, #tpu.dimension_semantics<arbitrary>], iteration_bounds = array<i64: 1, 1>, scalar_prefetch = 0 : i64, scratch_operands = 0 : i64, tpu.core_type = #tpu.core_type<tc>, window_params = [{transform_indices = @transform_0, window_bounds = array<i64: 8, 16>}, {transform_indices = @transform_1, window_bounds = array<i64: 8, 1>}, {transform_indices = @transform_2, window_bounds = array<i64: 1, 8, 1>}]} {
    %c0_i32 = arith.constant 0 : i32
    %0 = arith.cmpi eq, %arg1, %c0_i32 : i32
    %1 = arith.extui %0 : i1 to i32
    %c0_i32_0 = arith.constant 0 : i32
    %2 = arith.cmpi ne, %1, %c0_i32_0 : i32
    scf.if %2 {
      %cst_20 = arith.constant 0.000000e+00 : f32
      %59 = vector.broadcast %cst_20 : f32 to vector<8x1xf32>
      %c0_21 = arith.constant 0 : index
      %c0_22 = arith.constant 0 : index
      %c0_23 = arith.constant 0 : index
      %60 = vector.load %arg4[%c0_21, %c0_22, %c0_23] : memref<1x8x1xf32, #tpu.memory_space<vmem>>, vector<1x8x1xf32>
      %61 = vector.shape_cast %60 : vector<1x8x1xf32> to vector<8x1xf32>
      %62 = vector.shape_cast %59 : vector<8x1xf32> to vector<1x8x1xf32>
      tpu.vector_store %arg4[%c0_21, %c0_22, %c0_23], %62 {strides = array<i32>} : memref<1x8x1xf32, #tpu.memory_space<vmem>>, vector<1x8x1xf32>,
    } else {
    }
    %c0 = arith.constant 0 : index
    %c0_1 = arith.constant 0 : index
    %3 = vector.load %arg2[%c0, %c0_1] : memref<8x16xf32, #tpu.memory_space<vmem>>, vector<8x16xf32>
    %cst = arith.constant dense<0xFF800000> : vector<8xf32>
    %4 = vector.multi_reduction <maximumf>, %3, %cst [1] : vector<8x16xf32> to vector<8xf32>
    %5 = vector.shape_cast %4 : vector<8xf32> to vector<8x1xf32>
    %6 = vector.broadcast %5 : vector<8x1xf32> to vector<8x16xf32>
    %7 = arith.subf %3, %6 : vector<8x16xf32>
    %8 = math.exp %7 : vector<8x16xf32>
    %cst_2 = arith.constant dense<0.000000e+00> : vector<8xf32>
    %9 = vector.multi_reduction <add>, %8, %cst_2 [1] : vector<8x16xf32> to vector<8xf32>
    %10 = vector.shape_cast %9 : vector<8xf32> to vector<8x1xf32>
    %11 = tpu.reciprocal %10 : vector<8x1xf32> -> vector<8x1xf32>
    %12 = vector.broadcast %11 : vector<8x1xf32> to vector<8x16xf32>
    %13 = arith.mulf %8, %12 : vector<8x16xf32>
    %cst_3 = arith.constant 9.99999971E-10 : f32
    %14 = vector.broadcast %cst_3 : f32 to vector<8x16xf32>
    %15 = arith.addf %13, %14 : vector<8x16xf32>
    %c0_4 = arith.constant 0 : index
    %c0_5 = arith.constant 0 : index
    %16 = vector.load %arg3[%c0_4, %c0_5] : memref<8x1xi32, #tpu.memory_space<vmem>>, vector<8x1xi32>
    %17 = tpu.iota {dimensions = array<i32: 1>} : vector<8x16xi32>
    %18 = vector.broadcast %16 : vector<8x1xi32> to vector<8x16xi32>
    %19 = arith.cmpi eq, %17, %18 : vector<8x16xi32>
    %20 = arith.mulf %15, %15 : vector<8x16xf32>
    %cst_6 = arith.constant 1.000000e+00 : f32
    %21 = vector.broadcast %cst_6 : f32 to vector<8x16xf32>
    %22 = arith.subf %21, %15 : vector<8x16xf32>
    %23 = math.log %22 : vector<8x16xf32>
    %24 = arith.mulf %20, %23 : vector<8x16xf32>
    %cst_7 = arith.constant dense<0.000000e+00> : vector<8xf32>
    %25 = vector.multi_reduction <add>, %24, %cst_7 [1] : vector<8x16xf32> to vector<8xf32>
    %26 = vector.shape_cast %25 : vector<8xf32> to vector<8x1xf32>
    %cst_8 = arith.constant 0.000000e+00 : f32
    %27 = vector.broadcast %cst_8 : f32 to vector<8x16xf32>
    %28 = arith.select %19, %15, %27 : vector<8x16xi1>, vector<8x16xf32>
    %cst_9 = arith.constant dense<0.000000e+00> : vector<8xf32>
    %29 = vector.multi_reduction <add>, %28, %cst_9 [1] : vector<8x16xf32> to vector<8xf32>
    %30 = vector.shape_cast %29 : vector<8xf32> to vector<8x1xf32>
    %31 = arith.mulf %30, %30 : vector<8x1xf32>
    %cst_10 = arith.constant 1.000000e+00 : f32
    %32 = vector.broadcast %cst_10 : f32 to vector<8x1xf32>
    %33 = arith.subf %32, %30 : vector<8x1xf32>
    %34 = math.log %33 : vector<8x1xf32>
    %35 = arith.mulf %31, %34 : vector<8x1xf32>
    %cst_11 = arith.constant 1.000000e+00 : f32
    %36 = vector.broadcast %cst_11 : f32 to vector<8x1xf32>
    %37 = arith.subf %36, %30 : vector<8x1xf32>
    %38 = arith.mulf %37, %37 : vector<8x1xf32>
    %39 = math.log %30 : vector<8x1xf32>
    %40 = arith.mulf %38, %39 : vector<8x1xf32>
    %41 = arith.subf %26, %35 : vector<8x1xf32>
    %42 = arith.addf %41, %40 : vector<8x1xf32>
    %c1_i32 = arith.constant 1 : i32
    %43 = arith.muli %arg0, %c1_i32 : i32
    %44 = arith.addi %43, %arg1 : i32
    %c8_i32 = arith.constant 8 : i32
    %45 = arith.muli %44, %c8_i32 : i32
    %46 = tpu.iota {dimensions = array<i32: 0>} : vector<8x1xi32>
    %47 = vector.broadcast %45 : i32 to vector<8x1xi32>
    %48 = arith.addi %47, %46 : vector<8x1xi32>
    %c8_i32_12 = arith.constant 8 : i32
    %49 = vector.broadcast %c8_i32_12 : i32 to vector<8x1xi32>
    %50 = arith.cmpi slt, %48, %49 : vector<8x1xi32>
    %cst_13 = arith.constant 0.000000e+00 : f32
    %51 = vector.broadcast %cst_13 : f32 to vector<8x1xf32>
    %52 = arith.select %50, %42, %51 : vector<8x1xi1>, vector<8x1xf32>
    %c0_14 = arith.constant 0 : index
    %c0_15 = arith.constant 0 : index
    %c0_16 = arith.constant 0 : index
    %53 = vector.load %arg4[%c0_14, %c0_15, %c0_16] : memref<1x8x1xf32, #tpu.memory_space<vmem>>, vector<1x8x1xf32>
    %54 = vector.shape_cast %53 : vector<1x8x1xf32> to vector<8x1xf32>
    %55 = arith.addf %54, %52 : vector<8x1xf32>
    %c0_17 = arith.constant 0 : index
    %c0_18 = arith.constant 0 : index
    %c0_19 = arith.constant 0 : index
    %56 = vector.load %arg4[%c0_17, %c0_18, %c0_19] : memref<1x8x1xf32, #tpu.memory_space<vmem>>, vector<1x8x1xf32>
    %57 = vector.shape_cast %56 : vector<1x8x1xf32> to vector<8x1xf32>
    %58 = vector.shape_cast %55 : vector<8x1xf32> to vector<1x8x1xf32>
    tpu.vector_store %arg4[%c0_17, %c0_18, %c0_19], %58 {strides = array<i32>} : memref<1x8x1xf32, #tpu.memory_space<vmem>>, vector<1x8x1xf32>,
    return
  }
  func.func @transform_0(%arg0: i32, %arg1: i32) -> (i32, i32) {
    %c1_i32 = arith.constant 1 : i32
    %0 = arith.muli %arg0, %c1_i32 : i32
    %1 = arith.addi %0, %arg1 : i32
    %c0_i32 = arith.constant 0 : i32
    %c0_i32_0 = arith.constant 0 : i32
    return %1, %c0_i32 : i32, i32
  }
  func.func @transform_1(%arg0: i32, %arg1: i32) -> (i32, i32) {
    %c1_i32 = arith.constant 1 : i32
    %0 = arith.muli %arg0, %c1_i32 : i32
    %1 = arith.addi %0, %arg1 : i32
    %c0_i32 = arith.constant 0 : i32
    %c0_i32_0 = arith.constant 0 : i32
    return %1, %c0_i32 : i32, i32
  }
  func.func @transform_2(%arg0: i32, %arg1: i32) -> (i32, i32, i32) {
    %c0_i32 = arith.constant 0 : i32
    %c0_i32_0 = arith.constant 0 : i32
    %c0_i32_1 = arith.constant 0 : i32
    return %arg0, %c0_i32, %c0_i32_0 : i32, i32, i32
  }
}

</mosaic_0001>

<llo_original>
// kernel: tpu_custom_call.1
$region0: #{tpu_custom_call.1}
  #allocation0 [shape = 'u32[]', space=smem, size = 0x4, offset = 0x4, fixed_abs, tag = 'smem constant byte address 0x4 - core index']
  #allocation1 [shape = 'u32[144,128]{1,0:T(1,128)}', space=vmem, size = 0x12000, scoped, tag = 'internal scratch']
  %s0 = inlined_call_operand.hbm [shape: f32[8,16], index: 0, kind: input, shape index: {}]
  %s1 = inlined_call_operand.hbm [shape: s32[8,1], index: 1, kind: input, shape index: {}]
  %s2 = inlined_call_operand.hbm [shape: f32[1,8,1], index: 2, kind: output, shape index: {}]
  %s3 = sld [smem:[#allocation0]]
  $region30: #{tpu_custom_call.1} parent=0
    _
  %s5 = ssub.s32 1, %s3
  %s6 = scalar_select 0, %s5, %s3
  $region1: #{tpu_custom_call.1} parent=0
    #allocation2 [shape = 'u8[4096]{0}', space=vmem, size = 0x1000, scoped, tag = 'input window, operand 0, single buffered']
    #allocation3 [shape = 's32[1]{0}', space=sflag, size = 0x4, scoped, tag = 'scoped memory for tpu_custom_call.1']
    #allocation4 [shape = 's32[1]{0}', space=sflag, size = 0x4, scoped, tag = 'scoped memory for tpu_custom_call.1']
    #allocation5 [shape = 'u8[4096]{0}', space=vmem, size = 0x1000, scoped, tag = 'input window, operand 1, single buffered']
    #allocation6 [shape = 's32[1]{0}', space=sflag, size = 0x4, scoped, tag = 'scoped memory for tpu_custom_call.1']
    #allocation7 [shape = 'u8[4096]{0}', space=vmem, size = 0x1000, scoped, tag = 'output window, operand 0, single buffered']
    %7 = vsyncpa [#allocation3], 0
    %8 = vsyncpa [#allocation6], 0
    %9 = vsyncpa [#allocation4], 0
    // Predicated region
    $region2: #{tpu_custom_call.1} parent=1 // pred_check
      _
    $region3: #{tpu_custom_call.1} parent=1 // pred_check_branch
      %11 = sbr.rel (0) target = $region5
    $region4: #{tpu_custom_call.1} parent=1 // pred_region
      %s12 = sadd.s32 0, 0
      %s14 = ssub.s32 128, 128
      %15 = vsyncadd [#allocation3], %s14
      %s16 = smul.addr %s12, 128
      %s17 = scalar_lea.hbm %s0, %s16
      %s19 = sshll.u32 [#allocation2], 4
      %s20 = int_to_ptr.vmem [resolvable:$true] %s19
      %22 = dma.hbm_to_vmem [thread:$0]  %s17, 128, %s20, [#allocation3]
    $region5: #{tpu_custom_call.1} parent=1 // pred_fallthru
      _
    // Predicated region
    $region6: #{tpu_custom_call.1} parent=1 // pred_check
      _
    $region7: #{tpu_custom_call.1} parent=1 // pred_check_branch
      %24 = sbr.rel (0) target = $region9
    $region8: #{tpu_custom_call.1} parent=1 // pred_region
      %s25 = sadd.s32 0, 0
      %s27 = ssub.s32 128, 128
      %28 = vsyncadd [#allocation6], %s27
      %s29 = smul.addr %s25, 128
      %s30 = scalar_lea.hbm %s1, %s29
      %s32 = sshll.u32 [#allocation5], 4
      %s33 = int_to_ptr.vmem [resolvable:$true] %s32
      %35 = dma.hbm_to_vmem [thread:$0]  %s30, 128, %s33, [#allocation6]
    $region9: #{tpu_custom_call.1} parent=1 // pred_fallthru
      _
    // Predicated region
    $region10: #{tpu_custom_call.1} parent=1 // pred_check
      _
    $region11: #{tpu_custom_call.1} parent=1 // pred_check_branch
      %37 = sbr.rel (0) target = $region13
    $region12: #{tpu_custom_call.1} parent=1 // pred_region
      %38 = dma.done [#allocation3], 128
    $region13: #{tpu_custom_call.1} parent=1 // pred_fallthru
      _
    // Predicated region
    $region14: #{tpu_custom_call.1} parent=1 // pred_check
      _
    $region15: #{tpu_custom_call.1} parent=1 // pred_check_branch
      %40 = sbr.rel (0) target = $region17
    $region16: #{tpu_custom_call.1} parent=1 // pred_region
      %41 = dma.done [#allocation6], 128
    $region17: #{tpu_custom_call.1} parent=1 // pred_fallthru
      _
    %s42 = sadd.s32 0, 0
    %s43 = sadd.s32 0, 0
    %p44 = scmp.eq.s32.totalorder 0, 0
    // Predicated region
    $region18: #{tpu_custom_call.1} parent=1 // pred_check
      %p45 = pneg %p44
    $region19: #{tpu_custom_call.1} parent=1 // pred_check_branch
      %47 = sbr.rel (%p45) target = $region21
    $region20: #{tpu_custom_call.1} parent=1 // pred_region
      %vm48 = vcmask 7168
      %49 = vst.msk [vmem:[#allocation7] sm:$0xff] %vm48, 0.0
    $region21: #{tpu_custom_call.1} parent=1 // pred_fallthru
      _
    %v50 = vld [vmem:[#allocation2] sm:$0xff]
    %vm51 = vcmask 130048
    %v52 = vsel %vm51, %v50, -inf
    %53 = vmax.xlane.f32.xlu0 %v52
    %v54 = vpop.xlane.xlu0 %53
    %v55 = vsub.f32 %v50, %v54
    %v56 = vmul.f32 %v55, 1.442695
    %v57 = vpow.pop %v56
    %v58 = vsel %vm51, %v57, 0.0
    %59 = vadd.xlane.f32.xlu0 %v58
    %v60 = vpop.xlane.xlu0 %59
    %v61 = vrcp.pop %v60
    %v62 = vmul.f32 %v57, %v61
    %v63 = vadd.f32 %v62, 1e-09
    %v64 = vld [vmem:[#allocation5] sm:$0xff]
    %v65 = vlaneseq
    %v66 = vand.u32 %v65, 127
    %67 = vset.pattern.permute.xlu0 0
    %68 = vperm.xlu0 %67, %v64
    %v69 = vpop.permute.xlu0 %68
    %vm70 = vcmp.eq.s32.totalorder %v66, %v69
    %v71 = vmul.f32 %v63, %v63
    %v72 = vsub.f32 1.0, %v63
    %v73 = vlog2.pop %v72
    %v74 = vmul.f32 %v73, 0.6931472
    %v75 = vmul.f32 %v71, %v74
    %v76 = vsel %vm51, %v75, 0.0
    %77 = vadd.xlane.f32.xlu0 %v76
    %v78 = vpop.xlane.xlu0 %77
    %v79 = vsel %vm70, %v63, 0.0
    %v80 = vsel %vm51, %v79, 0.0
    %81 = vadd.xlane.f32.xlu0 %v80
    %v82 = vpop.xlane.xlu0 %81
    %v83 = vmul.f32 %v82, %v82
    %v84 = vsub.f32 1.0, %v82
    %v85 = vlog2.pop %v84
    %v86 = vmul.f32 %v85, 0.6931472
    %v87 = vmul.f32 %v83, %v86
    %v88 = vmul.f32 %v84, %v84
    %v89 = vlog2.pop %v82
    %v90 = vmul.f32 %v89, 0.6931472
    %v91 = vmul.f32 %v88, %v90
    %v92 = vsub.f32 %v78, %v87
    %v93 = vadd.f32 %v92, %v91
    %s94 = sadd.s32 0, 0
    %s95 = smul.u32 %s94, 8
    %v96 = vlaneseq
    %v97 = vshrl.u32 %v96, 7
    %v98 = vstv %s95
    %v99 = vadd.s32 %v98, %v97
    %vm100 = vcmp.lt.s32.totalorder %v99, 8
    %v101 = vsel %vm100, %v93, 0.0
    %v102 = vld [vmem:[#allocation7] sm:$0xff]
    %v103 = vadd.f32 %v102, %v101
    %vm104 = vcmask 7168
    %105 = vst.msk [vmem:[#allocation7] sm:$0xff] %vm104, %v103
    // Predicated region
    $region22: #{tpu_custom_call.1} parent=1 // pred_check
      _
    $region23: #{tpu_custom_call.1} parent=1 // pred_check_branch
      %107 = sbr.rel (0) target = $region25
    $region24: #{tpu_custom_call.1} parent=1 // pred_region
      %s109 = ssub.s32 128, 128
      %110 = vsyncadd [#allocation4], %s109
      %s112 = sshll.u32 [#allocation7], 4
      %s113 = int_to_ptr.vmem [resolvable:$true] %s112
      %115 = dma.vmem_to_hbm [thread:$0]  %s113, 128, %s2, [#allocation4]
    $region25: #{tpu_custom_call.1} parent=1 // pred_fallthru
      _
    // Predicated region
    $region26: #{tpu_custom_call.1} parent=1 // pred_check
      _
    $region27: #{tpu_custom_call.1} parent=1 // pred_check_branch
      %117 = sbr.rel (0) target = $region29
    $region28: #{tpu_custom_call.1} parent=1 // pred_region
      %118 = dma.done [#allocation4], 128
    $region29: #{tpu_custom_call.1} parent=1 // pred_fallthru
      _
    %119 = vsyncpa [#allocation3], 1
    %120 = vsyncpa [#allocation6], 1
    %121 = vsyncpa [#allocation4], 1

</llo_original>
